<compile_context>
chip_gen: v7x
topology: tpu7x:2x2x1
jax: 0.10.0
libtpu: 0.0.40
codegen_flags: <defaults>
</compile_context>

<pallas_src>
import functools

import jax
import jax.numpy as jnp
from jax import lax
from jax.experimental import pallas as pl
from jax.experimental.pallas import tpu as pltpu


def _round_up(x, m):
    return -(-x // m) * m


def _double_conv_kernel(x_ref, w1_ref, b1_ref, w2_ref, b2_ref, o_ref, *,
                        K, Wp, halo_pad):
    """One (batch, spatial-tile) grid step.

    x_ref  : (1, Cin, Lin)      bf16  whole flattened zero-padded image
    w1_ref : (Cmid, KKCin_pad)  bf16  conv1 weights * BN1 scale (taps on lanes)
    b1_ref : (Cmid, 1)          f32   folded BN1 shift (incl. conv1 bias)
    w2_ref : (Cout, Cmid)       bf16  conv2 (1x1) weights * BN2 scale
    b2_ref : (Cout, 1)          f32   folded BN2 shift (incl. conv2 bias)
    o_ref  : (1, Cout, L)       bf16  output tile (flattened spatial on lanes)
    """
    cin = x_ref.shape[1]
    L = o_ref.shape[2]
    kkcin_pad = w1_ref.shape[1]
    cmid = w1_ref.shape[0]

    # One 128-aligned dynamic window load; every tap is a static slice of it.
    base = pl.multiple_of(pl.program_id(1) * L, 128)
    win = x_ref[0, :, pl.ds(base, L + halo_pad)]          # (Cin, L+halo) bf16

    taps = []
    for dy in range(K):
        for dx in range(K):
            off = dy * Wp + dx                            # static lane offset
            taps.append(win[:, off:off + L])              # (Cin, L)
    kkcin = K * K * cin
    if kkcin_pad > kkcin:                                 # sublane padding rows
        taps.append(jnp.zeros((kkcin_pad - kkcin, L), win.dtype))
    patch = jnp.concatenate(taps, axis=0)                 # (KKCin_pad, L) bf16

    # KxK conv (BN1 scale already folded into w1): ONE MXU matmul, f32 acc.
    y1 = jnp.dot(w1_ref[...], patch, preferred_element_type=jnp.float32)
    y1 = jnp.maximum(y1 + b1_ref[...], 0.0)               # shift + ReLU

    # 1x1 conv (BN2 scale folded into w2) on the otherwise-idle MXU.
    if cmid == 1:
        y2 = w2_ref[...].astype(jnp.float32) * y1         # degenerate contraction
    else:
        y2 = jnp.dot(w2_ref[...], y1.astype(jnp.bfloat16),
                     preferred_element_type=jnp.float32)
    y2 = jnp.maximum(y2 + b2_ref[...], 0.0)

    o_ref[...] = y2[None].astype(o_ref.dtype)             # lane-dense bf16 vst


def _vmem_config():
    """(VMEM budget for kernel blocks, vmem_limit_bytes) per TPU generation."""
    try:
        cap = int(pltpu.get_tpu_info().vmem_capacity_bytes)
    except Exception:                              # query unsupported -> conservative
        cap = 0
    if cap >= 96 * 1024 * 1024:                    # v5e / v6e: 128 MiB physical VMEM
        return 40 * 1024 * 1024, 64 * 1024 * 1024
    return 14 * 1024 * 1024, 32 * 1024 * 1024      # v7x-class (64 MiB) or unknown


def _pick_flat_tile(lout, n_batch, per_lane_bytes, fixed_bytes, budget_bytes,
                    min_grid_steps=4):
    """Tile length L (multiple of 128) over the flattened output axis.

    L is capped so (a) the L-dependent VMEM blocks fit the budget after the
    fixed input-image/weight buffers and (b) the grid has >= min_grid_steps
    steps so both v7x TensorCores get work.  No full-extent fallback: the
    caller pads the flat axis to n_tiles * L.
    """
    lout128 = _round_up(lout, 128)
    avail = budget_bytes - fixed_bytes
    l_cap = 128
    if avail > 0:
        l_cap = max(128, (avail // max(per_lane_bytes, 1)) // 128 * 128)
    want_tiles = max(1, -(-min_grid_steps // max(n_batch, 1)))
    l_split = max(128, (lout128 // want_tiles) // 128 * 128)
    L = max(128, min(l_cap, l_split, lout128))
    n_tiles = -(-lout // L)
    return L, n_tiles


def double_conv_pad_pallas(x_nchw, params, kernel_sz, *, out_dtype=jnp.bfloat16):
    """Eval-mode forward pass of DoubleConv_pad.  x_nchw: (N, Cin, H, W)."""
    pad = 1 if kernel_sz == 3 else 0
    eps = 1e-5
    N, Cin, H, W = x_nchw.shape
    K = kernel_sz
    Hp, Wp = H + 2 * pad, W + 2 * pad
    Ho, Wo = Hp - (K - 1), Wp - (K - 1)

    w1, b1 = params["w1"], params["b1"]            # (Cmid, Cin, K, K), (Cmid,)
    w2, b2 = params["w2"], params["b2"]            # (Cout, Cmid, 1, 1), (Cout,)
    Cmid, Cout = w1.shape[0], w2.shape[0]
    assert Cmid >= 1, "in_channels must be >= 2 so Cmid = in_channels // 2 >= 1"
    KKCin = K * K * Cin
    KKCin_pad = _round_up(KKCin, 16)               # bf16 sublane packing

    # Fold conv biases + eval-mode BN into per-channel weight scales (applied
    # in f32 BEFORE the bf16 cast) and additive shifts.
    s1 = params["bn1_gamma"] / jnp.sqrt(params["bn1_var"] + eps)
    b1f = params["bn1_beta"] + (b1 - params["bn1_mean"]) * s1
    s2 = params["bn2_gamma"] / jnp.sqrt(params["bn2_var"] + eps)
    b2f = params["bn2_beta"] + (b2 - params["bn2_mean"]) * s2

    w1_mat = jnp.transpose(w1, (0, 2, 3, 1)).reshape(Cmid, KKCin)   # (dy,dx,ci) cols
    w1_mat = (w1_mat * s1[:, None]).astype(jnp.bfloat16)
    w1_mat = jnp.pad(w1_mat, ((0, 0), (0, KKCin_pad - KKCin)))
    w2_mat = (w2[:, :, 0, 0] * s2[:, None]).astype(jnp.bfloat16)     # (Cout, Cmid)
    b1_k = b1f.reshape(Cmid, 1).astype(jnp.float32)
    b2_k = b2f.reshape(Cout, 1).astype(jnp.float32)

    # Flattened-padded layout: output pixel (r, c) lives at flat index r*Wp + c,
    # so tap (dy, dx) is a contiguous lane slice at static offset dy*Wp + dx.
    lout = Ho * Wp                                  # wrap cols sliced off at the end
    halo_pad = _round_up((K - 1) * (Wp + 1), 128) if K > 1 else 0

    budget, vmem_limit = _vmem_config()
    per_lane = 10 * Cout + 6 * Cin + 2 * KKCin_pad + 6 * Cmid        # bytes per lane
    fixed = (4 * Cin * _round_up(lout + halo_pad, 128)               # input, dbl-buf bf16
             + 4 * (Cmid * KKCin_pad + Cout * Cmid)                  # bf16 weights, dbl-buf
             + 16 * (Cmid + Cout)                                    # f32 shifts, dbl-buf
             + (1 << 20))                                            # Mosaic internal slack
    # TODO(synk): for very large Cin*H*W the whole-image-per-batch input block can
    # exceed the VMEM budget; a manual halo'd row pipeline (make_async_copy) would
    # be needed in that regime.
    L, n_tiles = _pick_flat_tile(lout, N, per_lane, fixed, budget)
    lout_pad = n_tiles * L
    lin_pad = lout_pad + halo_pad                   # both already multiples of 128

    xb = x_nchw.astype(jnp.bfloat16)
    xp = jnp.pad(xb, ((0, 0), (0, 0), (pad, pad), (pad, pad)))       # (N,Cin,Hp,Wp)
    x_flat = jnp.pad(xp.reshape(N, Cin, Hp * Wp),
                     ((0, 0), (0, 0), (0, lin_pad - Hp * Wp)))       # (N,Cin,Lin)

    kernel = functools.partial(_double_conv_kernel, K=K, Wp=Wp, halo_pad=halo_pad)

    cost = pl.CostEstimate(
        flops=2 * N * lout_pad * (KKCin_pad * Cmid + Cmid * Cout),
        transcendentals=0,
        bytes_accessed=(x_flat.size * 2 + w1_mat.size * 2 + w2_mat.size * 2
                        + (b1_k.size + b2_k.size) * 4 + N * Cout * lout_pad * 2),
    )

    out_flat = pl.pallas_call(
        kernel,
        out_shape=jax.ShapeDtypeStruct((N, Cout, lout_pad), jnp.bfloat16),
        grid_spec=pltpu.PrefetchScalarGridSpec(
            num_scalar_prefetch=0,
            grid=(N, n_tiles),
            in_specs=[
                pl.BlockSpec((1, Cin, lin_pad), lambda n, t: (n, 0, 0)),
                pl.BlockSpec((Cmid, KKCin_pad), lambda n, t: (0, 0)),
                pl.BlockSpec((Cmid, 1), lambda n, t: (0, 0)),
                pl.BlockSpec((Cout, Cmid), lambda n, t: (0, 0)),
                pl.BlockSpec((Cout, 1), lambda n, t: (0, 0)),
            ],
            out_specs=pl.BlockSpec((1, Cout, L), lambda n, t: (n, 0, t)),
        ),
        compiler_params=pltpu.CompilerParams(
            dimension_semantics=("parallel", "parallel"),
            vmem_limit_bytes=int(vmem_limit)),
        cost_estimate=cost,
    )(x_flat, w1_mat, b1_k, w2_mat, b2_k)

    # Drop the padded tail and the per-row wrap columns; layout is already NCHW.
    out = out_flat[:, :, :lout].reshape(N, Cout, Ho, Wp)[:, :, :, :Wo]
    return out.astype(out_dtype)


def _reference(x_nchw, params, kernel_sz):
    """Pure-JAX reference (eval-mode BN; bf16 first conv mirrors the kernel)."""
    pad = 1 if kernel_sz == 3 else 0
    eps = 1e-5
    w1, b1, w2, b2 = params["w1"], params["b1"], params["w2"], params["b2"]
    y = lax.conv_general_dilated(
        x_nchw.astype(jnp.bfloat16), w1.astype(jnp.bfloat16),
        window_strides=(1, 1), padding=[(pad, pad), (pad, pad)],
        dimension_numbers=("NCHW", "OIHW", "NCHW"),
        preferred_element_type=jnp.float32)
    y = y + b1[None, :, None, None]
    y = (y - params["bn1_mean"][None, :, None, None]) / jnp.sqrt(
        params["bn1_var"][None, :, None, None] + eps)
    y = y * params["bn1_gamma"][None, :, None, None] + params["bn1_beta"][None, :, None, None]
    y = jnp.maximum(y, 0.0)
    y = lax.conv_general_dilated(
        y, w2.astype(jnp.float32), window_strides=(1, 1),
        padding=[(0, 0), (0, 0)],
        dimension_numbers=("NCHW", "OIHW", "NCHW"),
        preferred_element_type=jnp.float32)
    y = y + b2[None, :, None, None]
    y = (y - params["bn2_mean"][None, :, None, None]) / jnp.sqrt(
        params["bn2_var"][None, :, None, None] + eps)
    y = y * params["bn2_gamma"][None, :, None, None] + params["bn2_beta"][None, :, None, None]
    y = jnp.maximum(y, 0.0)
    return y


def make_params(key, in_channels, out_channels, kernel_sz):
    """Deterministic params matching the PyTorch module's shapes (+ BN stats)."""
    cmid = in_channels // 2
    k1, k2, k3, k4 = jax.random.split(key, 4)
    fan1 = in_channels * kernel_sz * kernel_sz
    fan2 = cmid
    bound1 = 1.0 / jnp.sqrt(fan1)
    bound2 = 1.0 / jnp.sqrt(fan2)
    return {
        "w1": jax.random.uniform(k1, (cmid, in_channels, kernel_sz, kernel_sz),
                                 jnp.float32, -bound1, bound1),
        "b1": jax.random.uniform(k2, (cmid,), jnp.float32, -bound1, bound1),
        "w2": jax.random.uniform(k3, (out_channels, cmid, 1, 1),
                                 jnp.float32, -bound2, bound2),
        "b2": jax.random.uniform(k4, (out_channels,), jnp.float32,
                                 -bound2, bound2),
        # BatchNorm affine + running stats (PyTorch defaults).
        "bn1_gamma": jnp.ones((cmid,), jnp.float32),
        "bn1_beta": jnp.zeros((cmid,), jnp.float32),
        "bn1_mean": jnp.zeros((cmid,), jnp.float32),
        "bn1_var": jnp.ones((cmid,), jnp.float32),
        "bn2_gamma": jnp.ones((out_channels,), jnp.float32),
        "bn2_beta": jnp.zeros((out_channels,), jnp.float32),
        "bn2_mean": jnp.zeros((out_channels,), jnp.float32),
        "bn2_var": jnp.ones((out_channels,), jnp.float32),
    }


if __name__ == "__main__":
    key = jax.random.PRNGKey(0)
    kx, kp = jax.random.split(key)

    in_channels, out_channels, kernel_sz = 4, 8, 3
    N, H, W = 2, 16, 16

    x = jax.random.normal(kx, (N, in_channels, H, W), jnp.float32)
    params = make_params(kp, in_channels, out_channels, kernel_sz)

    fwd = jax.jit(functools.partial(double_conv_pad_pallas, kernel_sz=kernel_sz))
    out = jax.block_until_ready(fwd(x, params))

    ref = _reference(x, params, kernel_sz)
    assert out.shape == (N, out_channels, H, W), out.shape
    assert out.dtype == jnp.bfloat16, out.dtype
    err = float(jnp.max(jnp.abs(out.astype(jnp.float32) - ref)))
    assert err < 5e-2, err

    print("KERNEL_OK")
</pallas_src>

<mosaic_0001>
module attributes {stable_mosaic.version = 11 : i64} {
  func.func @_double_conv_kernel(%arg0: i32, %arg1: i32, %arg2: memref<1x4x512xbf16, #tpu.memory_space<vmem>>, %arg3: memref<2x48xbf16, #tpu.memory_space<vmem>>, %arg4: memref<2x1xf32, #tpu.memory_space<vmem>>, %arg5: memref<8x2xbf16, #tpu.memory_space<vmem>>, %arg6: memref<8x1xf32, #tpu.memory_space<vmem>>, %arg7: memref<1x8x128xbf16, #tpu.memory_space<vmem>>) attributes {dimension_semantics = [#tpu.dimension_semantics<parallel>, #tpu.dimension_semantics<parallel>], iteration_bounds = array<i64: 2, 3>, scalar_prefetch = 0 : i64, scratch_operands = 0 : i64, tpu.core_type = #tpu.core_type<tc>, window_params = [{transform_indices = @transform_0, window_bounds = array<i64: 1, 4, 512>}, {pipeline_mode = #tpu.pipeline_mode<synchronous>, transform_indices = @transform_1, window_bounds = array<i64: 2, 48>}, {pipeline_mode = #tpu.pipeline_mode<synchronous>, transform_indices = @transform_2, window_bounds = array<i64: 2, 1>}, {pipeline_mode = #tpu.pipeline_mode<synchronous>, transform_indices = @transform_3, window_bounds = array<i64: 8, 2>}, {pipeline_mode = #tpu.pipeline_mode<synchronous>, transform_indices = @transform_4, window_bounds = array<i64: 8, 1>}, {transform_indices = @transform_5, window_bounds = array<i64: 1, 8, 128>}]} {
    %c128_i32 = arith.constant 128 : i32
    %0 = arith.muli %arg1, %c128_i32 : i32
    %1 = tpu.assume_multiple %0, 128 : i32
    %c0 = arith.constant 0 : index
    %c0_0 = arith.constant 0 : index
    %2 = arith.index_cast %1 : i32 to index
    %3 = vector.load %arg2[%c0, %c0_0, %2] : memref<1x4x512xbf16, #tpu.memory_space<vmem>>, vector<1x4x256xbf16>
    %4 = vector.shape_cast %3 : vector<1x4x256xbf16> to vector<4x256xbf16>
    %5 = vector.extract_strided_slice %4 {offsets = [0, 0], sizes = [4, 128], strides = [1, 1]} : vector<4x256xbf16> to vector<4x128xbf16>
    %6 = vector.extract_strided_slice %4 {offsets = [0, 1], sizes = [4, 128], strides = [1, 1]} : vector<4x256xbf16> to vector<4x128xbf16>
    %7 = vector.extract_strided_slice %4 {offsets = [0, 2], sizes = [4, 128], strides = [1, 1]} : vector<4x256xbf16> to vector<4x128xbf16>
    %8 = vector.extract_strided_slice %4 {offsets = [0, 18], sizes = [4, 128], strides = [1, 1]} : vector<4x256xbf16> to vector<4x128xbf16>
    %9 = vector.extract_strided_slice %4 {offsets = [0, 19], sizes = [4, 128], strides = [1, 1]} : vector<4x256xbf16> to vector<4x128xbf16>
    %10 = vector.extract_strided_slice %4 {offsets = [0, 20], sizes = [4, 128], strides = [1, 1]} : vector<4x256xbf16> to vector<4x128xbf16>
    %11 = vector.extract_strided_slice %4 {offsets = [0, 36], sizes = [4, 128], strides = [1, 1]} : vector<4x256xbf16> to vector<4x128xbf16>
    %12 = vector.extract_strided_slice %4 {offsets = [0, 37], sizes = [4, 128], strides = [1, 1]} : vector<4x256xbf16> to vector<4x128xbf16>
    %13 = vector.extract_strided_slice %4 {offsets = [0, 38], sizes = [4, 128], strides = [1, 1]} : vector<4x256xbf16> to vector<4x128xbf16>
    %cst = arith.constant 0.000000e+00 : bf16
    %14 = vector.broadcast %cst : bf16 to vector<12x128xbf16>
    %15 = tpu.concatenate %5, %6, %7, %8, %9, %10, %11, %12, %13, %14 in 0 : vector<4x128xbf16>, vector<4x128xbf16>, vector<4x128xbf16>, vector<4x128xbf16>, vector<4x128xbf16>, vector<4x128xbf16>, vector<4x128xbf16>, vector<4x128xbf16>, vector<4x128xbf16>, vector<12x128xbf16> -> vector<48x128xbf16>
    %c0_1 = arith.constant 0 : index
    %c0_2 = arith.constant 0 : index
    %16 = vector.load %arg3[%c0_1, %c0_2] : memref<2x48xbf16, #tpu.memory_space<vmem>>, vector<2x48xbf16>
    %cst_3 = arith.constant dense<0.000000e+00> : vector<2x128xf32>
    %17 = tpu.matmul %16, %15, %cst_3 {dimension_numbers = #tpu.dot_dimension_numbers<[1], [0], [0], [1], [0, 0, 1, 1], [], []>} : vector<2x48xbf16>, vector<48x128xbf16>, vector<2x128xf32> -> vector<2x128xf32>
    %c0_4 = arith.constant 0 : index
    %c0_5 = arith.constant 0 : index
    %18 = vector.load %arg4[%c0_4, %c0_5] : memref<2x1xf32, #tpu.memory_space<vmem>>, vector<2x1xf32>
    %19 = vector.broadcast %18 : vector<2x1xf32> to vector<2x128xf32>
    %20 = arith.addf %17, %19 : vector<2x128xf32>
    %cst_6 = arith.constant 0.000000e+00 : f32
    %21 = vector.broadcast %cst_6 : f32 to vector<2x128xf32>
    %22 = arith.maximumf %20, %21 : vector<2x128xf32>
    %c0_7 = arith.constant 0 : index
    %c0_8 = arith.constant 0 : index
    %23 = vector.load %arg5[%c0_7, %c0_8] : memref<8x2xbf16, #tpu.memory_space<vmem>>, vector<8x2xbf16>
    %24 = arith.truncf %22 : vector<2x128xf32> to vector<2x128xbf16>
    %cst_9 = arith.constant dense<0.000000e+00> : vector<8x128xf32>
    %25 = tpu.matmul %23, %24, %cst_9 {dimension_numbers = #tpu.dot_dimension_numbers<[1], [0], [0], [1], [0, 0, 1, 1], [], []>} : vector<8x2xbf16>, vector<2x128xbf16>, vector<8x128xf32> -> vector<8x128xf32>
    %c0_10 = arith.constant 0 : index
    %c0_11 = arith.constant 0 : index
    %26 = vector.load %arg6[%c0_10, %c0_11] : memref<8x1xf32, #tpu.memory_space<vmem>>, vector<8x1xf32>
    %27 = vector.broadcast %26 : vector<8x1xf32> to vector<8x128xf32>
    %28 = arith.addf %25, %27 : vector<8x128xf32>
    %cst_12 = arith.constant 0.000000e+00 : f32
    %29 = vector.broadcast %cst_12 : f32 to vector<8x128xf32>
    %30 = arith.maximumf %28, %29 : vector<8x128xf32>
    %31 = vector.shape_cast %30 : vector<8x128xf32> to vector<1x8x128xf32>
    %32 = arith.truncf %31 : vector<1x8x128xf32> to vector<1x8x128xbf16>
    %c0_13 = arith.constant 0 : index
    %c0_14 = arith.constant 0 : index
    %c0_15 = arith.constant 0 : index
    %33 = vector.load %arg7[%c0_13, %c0_14, %c0_15] : memref<1x8x128xbf16, #tpu.memory_space<vmem>>, vector<1x8x128xbf16>
    tpu.vector_store %arg7[%c0_13, %c0_14, %c0_15], %32 {strides = array<i32>} : memref<1x8x128xbf16, #tpu.memory_space<vmem>>, vector<1x8x128xbf16>,
    return
  }
  func.func @transform_0(%arg0: i32, %arg1: i32) -> (i32, i32, i32) {
    %c0_i32 = arith.constant 0 : i32
    %c0_i32_0 = arith.constant 0 : i32
    %c0_i32_1 = arith.constant 0 : i32
    return %arg0, %c0_i32, %c0_i32_0 : i32, i32, i32
  }
  func.func @transform_1(%arg0: i32, %arg1: i32) -> (i32, i32) {
    %c0_i32 = arith.constant 0 : i32
    %c0_i32_0 = arith.constant 0 : i32
    %c0_i32_1 = arith.constant 0 : i32
    return %c0_i32, %c0_i32_0 : i32, i32
  }
  func.func @transform_2(%arg0: i32, %arg1: i32) -> (i32, i32) {
    %c0_i32 = arith.constant 0 : i32
    %c0_i32_0 = arith.constant 0 : i32
    %c0_i32_1 = arith.constant 0 : i32
    return %c0_i32, %c0_i32_0 : i32, i32
  }
  func.func @transform_3(%arg0: i32, %arg1: i32) -> (i32, i32) {
    %c0_i32 = arith.constant 0 : i32
    %c0_i32_0 = arith.constant 0 : i32
    %c0_i32_1 = arith.constant 0 : i32
    return %c0_i32, %c0_i32_0 : i32, i32
  }
  func.func @transform_4(%arg0: i32, %arg1: i32) -> (i32, i32) {
    %c0_i32 = arith.constant 0 : i32
    %c0_i32_0 = arith.constant 0 : i32
    %c0_i32_1 = arith.constant 0 : i32
    return %c0_i32, %c0_i32_0 : i32, i32
  }
  func.func @transform_5(%arg0: i32, %arg1: i32) -> (i32, i32, i32) {
    %c0_i32 = arith.constant 0 : i32
    %c0_i32_0 = arith.constant 0 : i32
    return %arg0, %c0_i32, %arg1 : i32, i32, i32
  }
}

</mosaic_0001>

<llo_original>
// kernel: double_conv_pad_pallas.1
$region0: #{double_conv_pad_pallas.1}
  #allocation0 [shape = 'u32[]', space=smem, size = 0x4, offset = 0x4, fixed_abs, tag = 'smem constant byte address 0x4 - core index']
  #allocation1 [shape = 'u32[144,128]{1,0:T(1,128)}', space=vmem, size = 0x12000, scoped, tag = 'internal scratch']
  %s0 = inlined_call_operand.vmem [shape: bf16[2,4,512], index: 0, kind: input, shape index: {}]
  %s1 = inlined_call_operand.vmem [shape: bf16[2,48], index: 1, kind: input, shape index: {}]
  %s2 = inlined_call_operand.vmem [shape: f32[2,1], index: 2, kind: input, shape index: {}]
  %s3 = inlined_call_operand.vmem [shape: bf16[8,2], index: 3, kind: input, shape index: {}]
  %s4 = inlined_call_operand.vmem [shape: f32[8,1], index: 4, kind: input, shape index: {}]
  %s5 = inlined_call_operand.vmem [shape: bf16[2,8,384], index: 5, kind: output, shape index: {}]
  %s6 = sld [smem:[#allocation0]]
  $region53: #{double_conv_pad_pallas.1} parent=0
    _
  %s8 = ssub.s32 1, %s6
  %s9 = scalar_select 0, %s8, %s6
  loop: start=0, step=1, limit=8
  $region2: #{double_conv_pad_pallas.1} parent=0 // loop_pre_header
    _
  $region3: #{double_conv_pad_pallas.1} parent=0 // loop_header
    %s11 = sphi 0, %s15
    %p12 = scmp.ge.s32.totalorder %s11, 8
    %s18 = sphi 0, %s30
    %s19 = sphi 0, %s26
    %s20 = sphi 0, %s18
    %s21 = sphi 0, %s19
    %s22 = sphi 0, %s20
    %s23 = sphi 0, %s21
    %s33 = sphi 0, %s35
    %s36 = sphi 0, %s33
    %s37 = sphi 0, %s36
    %s53 = sphi 0, %s37
    %s57 = sphi 0, %s57
    %s59 = sphi 0, %s57
    %s60 = sphi 0, %s59
    %s74 = sphi 0, %s60
    %s78 = sphi 0, %s78
    %s80 = sphi 0, %s78
    %s81 = sphi 0, %s80
    %s95 = sphi 0, %s81
    %s99 = sphi 0, %s99
    %s101 = sphi 0, %s99
    %s102 = sphi 0, %s101
    %s116 = sphi 0, %s102
    %s120 = sphi 0, %s120
    %s122 = sphi 0, %s120
    %s123 = sphi 0, %s122
    %s137 = sphi 0, %s123
    %s145 = sphi 0, %s147
    %s148 = sphi 0, %s145
    %s149 = sphi 0, %s148
    %s165 = sphi 0, %s149
  $region4: #{double_conv_pad_pallas.1} parent=0 // loop_header_branch
    %14 = sbr.rel (%p12) target = $region8
  $region5: #{double_conv_pad_pallas.1} parent=0 // loop_body
    %s16 = ssub.s32 %s11, 1
    %s17 = ssub.s32 %s11, 2
    %s24 = sadd.s32 1, %s19
    %p25 = scmp.ge.s32.totalorder %s24, 3
    %s26 = scalar_select %p25, 0, %s24
    %s27 = sadd.s32 1, %s18
    %s28 = scalar_select %p25, %s27, %s18
    %p29 = scmp.ge.s32.totalorder %s28, 2
    %s30 = scalar_select %p29, 0, %s28
    %s31 = ssub.s32 %s18, %s30
    %p32 = scmp.eq.s32.totalorder %s31, 0
    %s34 = sadd.s32 %s33, 1
    %s35 = scalar_select %p32, %s33, %s34
    %p38 = pneg %p32
    %p39 = scmp.eq.s32.totalorder %s11, 5
    %p40 = por %p38, %p39
    %p41 = scmp.ne.s32.totalorder %s33, %s36
    %p42 = scmp.eq.s32.totalorder %s11, 0
    %p43 = por %p41, %p42
    %p44 = scmp.ne.s32.totalorder %s33, %s36
    %p45 = scmp.eq.s32.totalorder %s16, 5
    %p46 = por %p44, %p45
    %p47 = scmp.ne.s32.totalorder %s36, %s37
    %p48 = scmp.eq.s32.totalorder %s16, 0
    %p49 = por %p47, %p48
    %p50 = scmp.ne.s32.totalorder %s36, %s37
    %p51 = scmp.eq.s32.totalorder %s17, 5
    %p52 = por %p50, %p51
    %p54 = scmp.ne.s32.totalorder %s37, %s53
    %p55 = scmp.eq.s32.totalorder %s17, 0
    %p56 = por %p54, %p55
    %s58 = sadd.s32 %s57, 1
    %p61 = scmp.eq.s32.totalorder %s11, 5
    %p62 = scmp.ne.s32.totalorder %s57, %s59
    %p63 = scmp.eq.s32.totalorder %s11, 0
    %p64 = por %p62, %p63
    %p65 = scmp.ne.s32.totalorder %s57, %s59
    %p66 = scmp.eq.s32.totalorder %s16, 5
    %p67 = por %p65, %p66
    %p68 = scmp.ne.s32.totalorder %s59, %s60
    %p69 = scmp.eq.s32.totalorder %s16, 0
    %p70 = por %p68, %p69
    %p71 = scmp.ne.s32.totalorder %s59, %s60
    %p72 = scmp.eq.s32.totalorder %s17, 5
    %p73 = por %p71, %p72
    %p75 = scmp.ne.s32.totalorder %s60, %s74
    %p76 = scmp.eq.s32.totalorder %s17, 0
    %p77 = por %p75, %p76
    %s79 = sadd.s32 %s78, 1
    %p82 = scmp.eq.s32.totalorder %s11, 5
    %p83 = scmp.ne.s32.totalorder %s78, %s80
    %p84 = scmp.eq.s32.totalorder %s11, 0
    %p85 = por %p83, %p84
    %p86 = scmp.ne.s32.totalorder %s78, %s80
    %p87 = scmp.eq.s32.totalorder %s16, 5
    %p88 = por %p86, %p87
    %p89 = scmp.ne.s32.totalorder %s80, %s81
    %p90 = scmp.eq.s32.totalorder %s16, 0
    %p91 = por %p89, %p90
    %p92 = scmp.ne.s32.totalorder %s80, %s81
    %p93 = scmp.eq.s32.totalorder %s17, 5
    %p94 = por %p92, %p93
    %p96 = scmp.ne.s32.totalorder %s81, %s95
    %p97 = scmp.eq.s32.totalorder %s17, 0
    %p98 = por %p96, %p97
    %s100 = sadd.s32 %s99, 1
    %p103 = scmp.eq.s32.totalorder %s11, 5
    %p104 = scmp.ne.s32.totalorder %s99, %s101
    %p105 = scmp.eq.s32.totalorder %s11, 0
    %p106 = por %p104, %p105
    %p107 = scmp.ne.s32.totalorder %s99, %s101
    %p108 = scmp.eq.s32.totalorder %s16, 5
    %p109 = por %p107, %p108
    %p110 = scmp.ne.s32.totalorder %s101, %s102
    %p111 = scmp.eq.s32.totalorder %s16, 0
    %p112 = por %p110, %p111
    %p113 = scmp.ne.s32.totalorder %s101, %s102
    %p114 = scmp.eq.s32.totalorder %s17, 5
    %p115 = por %p113, %p114
    %p117 = scmp.ne.s32.totalorder %s102, %s116
    %p118 = scmp.eq.s32.totalorder %s17, 0
    %p119 = por %p117, %p118
    %s121 = sadd.s32 %s120, 1
    %p124 = scmp.eq.s32.totalorder %s11, 5
    %p125 = scmp.ne.s32.totalorder %s120, %s122
    %p126 = scmp.eq.s32.totalorder %s11, 0
    %p127 = por %p125, %p126
    %p128 = scmp.ne.s32.totalorder %s120, %s122
    %p129 = scmp.eq.s32.totalorder %s16, 5
    %p130 = por %p128, %p129
    %p131 = scmp.ne.s32.totalorder %s122, %s123
    %p132 = scmp.eq.s32.totalorder %s16, 0
    %p133 = por %p131, %p132
    %p134 = scmp.ne.s32.totalorder %s122, %s123
    %p135 = scmp.eq.s32.totalorder %s17, 5
    %p136 = por %p134, %p135
    %p138 = scmp.ne.s32.totalorder %s123, %s137
    %p139 = scmp.eq.s32.totalorder %s17, 0
    %p140 = por %p138, %p139
    %s141 = ssub.s32 %s18, %s30
    %s142 = ssub.s32 %s19, %s26
    %s143 = sor.u32 %s141, %s142
    %p144 = scmp.eq.s32.totalorder %s143, 0
    %s146 = sadd.s32 %s145, 1
    %s147 = scalar_select %p144, %s145, %s146
    %p150 = pneg %p144
    %p151 = scmp.eq.s32.totalorder %s11, 5
    %p152 = por %p150, %p151
    %p153 = scmp.ne.s32.totalorder %s145, %s148
    %p154 = scmp.eq.s32.totalorder %s11, 0
    %p155 = por %p153, %p154
    %p156 = scmp.ne.s32.totalorder %s145, %s148
    %p157 = scmp.eq.s32.totalorder %s16, 5
    %p158 = por %p156, %p157
    %p159 = scmp.ne.s32.totalorder %s148, %s149
    %p160 = scmp.eq.s32.totalorder %s16, 0
    %p161 = por %p159, %p160
    %p162 = scmp.ne.s32.totalorder %s148, %s149
    %p163 = scmp.eq.s32.totalorder %s17, 5
    %p164 = por %p162, %p163
    %p166 = scmp.ne.s32.totalorder %s149, %s165
    %p167 = scmp.eq.s32.totalorder %s17, 0
    %p168 = por %p166, %p167
    %p169 = scmp.le.s32.totalorder 1, %s11
    %p170 = scmp.lt.s32.totalorder %s11, 7
    %p171 = pnand %p169, %p170
    %p172 = pneg %p171
    // Predicated region
    $region9: #{double_conv_pad_pallas.1} parent=5 // pred_check
      _
    $region10: #{double_conv_pad_pallas.1} parent=5 // pred_check_branch
      %174 = sbr.rel (%p171) target = $region12
    $region11: #{double_conv_pad_pallas.1} parent=5 // pred_region
      %s175 = ssub.s32 %s11, 1
      // Predicated region
      $region13: #{double_conv_pad_pallas.1} parent=11 // pred_check
        %p176 = pneg %p70
      $region14: #{double_conv_pad_pallas.1} parent=11 // pred_check_branch
        %178 = sbr.rel (%p176) target = $region16
      $region15: #{double_conv_pad_pallas.1} parent=11 // pred_region
        _
      $region16: #{double_conv_pad_pallas.1} parent=11 // pred_fallthru
        _
      // Predicated region
      $region17: #{double_conv_pad_pallas.1} parent=11 // pred_check
        %p179 = pneg %p91
      $region18: #{double_conv_pad_pallas.1} parent=11 // pred_check_branch
        %181 = sbr.rel (%p179) target = $region20
      $region19: #{double_conv_pad_pallas.1} parent=11 // pred_region
        _
      $region20: #{double_conv_pad_pallas.1} parent=11 // pred_fallthru
        _
      // Predicated region
      $region21: #{double_conv_pad_pallas.1} parent=11 // pred_check
        %p182 = pneg %p112
      $region22: #{double_conv_pad_pallas.1} parent=11 // pred_check_branch
        %184 = sbr.rel (%p182) target = $region24
      $region23: #{double_conv_pad_pallas.1} parent=11 // pred_region
        _
      $region24: #{double_conv_pad_pallas.1} parent=11 // pred_fallthru
        _
      // Predicated region
      $region25: #{double_conv_pad_pallas.1} parent=11 // pred_check
        %p185 = pneg %p133
      $region26: #{double_conv_pad_pallas.1} parent=11 // pred_check_branch
        %187 = sbr.rel (%p185) target = $region28
      $region27: #{double_conv_pad_pallas.1} parent=11 // pred_region
        _
      $region28: #{double_conv_pad_pallas.1} parent=11 // pred_fallthru
        _
    $region12: #{double_conv_pad_pallas.1} parent=5 // pred_fallthru
      _
    %p188 = scmp.lt.s32.totalorder %s11, 6
    // Predicated region
    $region29: #{double_conv_pad_pallas.1} parent=5 // pred_check
      %p189 = pneg %p188
    $region30: #{double_conv_pad_pallas.1} parent=5 // pred_check_branch
      %191 = sbr.rel (%p189) target = $region32
    $region31: #{double_conv_pad_pallas.1} parent=5 // pred_region
      // Predicated region
      $region33: #{double_conv_pad_pallas.1} parent=31 // pred_check
        %p192 = pneg %p43
      $region34: #{double_conv_pad_pallas.1} parent=31 // pred_check_branch
        %194 = sbr.rel (%p192) target = $region36
      $region35: #{double_conv_pad_pallas.1} parent=31 // pred_region
        %p195 = scmp.lt.s32.totalorder %s18, 1
        %s196 = scalar_select %p195, %s18, 1
        %s197 = smul.addr %s196, 4
        %s198 = smul.addr %s197, 2
        %s199 = scalar_lea.vmem %s0, %s198
      $region36: #{double_conv_pad_pallas.1} parent=31 // pred_fallthru
        _
    $region32: #{double_conv_pad_pallas.1} parent=5 // pred_fallthru
      _
    %p200 = scmp.le.s32.totalorder 1, %s11
    %p201 = scmp.lt.s32.totalorder %s11, 7
    %p202 = pnand %p200, %p201
    %p203 = pneg %p202
    // Predicated region
    $region37: #{double_conv_pad_pallas.1} parent=5 // pred_check
      _
    $region38: #{double_conv_pad_pallas.1} parent=5 // pred_check_branch
      %205 = sbr.rel (%p202) target = $region40
    $region39: #{double_conv_pad_pallas.1} parent=5 // pred_region
      %s206 = ssub.s32 %s11, 1
      %p207 = scmp.lt.s32.totalorder %s20, 1
      %s208 = scalar_select %p207, %s20, 1
      %s209 = smul.addr %s208, 4
      %s210 = smul.addr %s209, 2
      %s211 = scalar_lea.vmem %s0, %s210
      %p212 = pneg %p49
      %p213 = pneg %p46
      %p214 = pneg %p70
      %p215 = pneg %p67
      %p216 = pneg %p91
      %p217 = pneg %p88
      %p218 = pneg %p112
      %p219 = pneg %p109
      %p220 = pneg %p133
      %p221 = pneg %p130
      %p222 = pneg %p161
      %p223 = pneg %p158
      %p224 = scmp.lt.s32.totalorder %s20, 1
      %s225 = scalar_select %p224, %s20, 1
      %p226 = scmp.lt.s32.totalorder %s21, 2
      %s227 = scalar_select %p226, %s21, 2
      %s228 = smul.addr %s225, 3
      %s229 = sadd.s32 %s227, %s228
      %s230 = smul.addr %s229, 4
      %s231 = scalar_lea.vmem %s5, %s230
      %p232 = scmp.lt.s32.totalorder %s20, 1
      %s233 = scalar_select %p232, %s20, 1
      %s234 = smul.addr %s233, 4
      %s235 = smul.addr %s234, 2
      %s236 = scalar_lea.vmem %s0, %s235
      %p237 = scmp.lt.s32.totalorder %s20, 1
      %s238 = scalar_select %p237, %s20, 1
      %p239 = scmp.lt.s32.totalorder %s21, 2
      %s240 = scalar_select %p239, %s21, 2
      %s241 = smul.addr %s238, 3
      %s242 = sadd.s32 %s240, %s241
      %s243 = smul.addr %s242, 4
      %s244 = scalar_lea.vmem %s5, %s243
      %s246 = smul.u32 %s21, 128
      %s247 = sshra.s32 %s246, 7
      %s248 = sand.u32 %s246, 127
      %s249 = smul.addr %s247, 2
      %s250 = scalar_lea.vmem %s236, %s249
      %v251 = vld [vmem:[%s250] sm:$0xf]
      %v253 = vcombine.low %v251, %v251
      %v255 = vunpack.c.l.s4 1983009808
      %v256 = vunpack.c.0.s8 %v255
      %v257 = vlaneseq
      %v258 = vshrl.u32 %v257, 7
      %v259 = vsub.s32 %v256, %v258
      %v260 = vrot.slane %v253, %v259
      %v262 = vunpack.c.l.s4 1983009808
      %v263 = vunpack.c.0.s8 %v262
      %v264 = vlaneseq
      %v265 = vshrl.u32 %v264, 7
      %v266 = vsub.s32 %v263, %v265
      %v267 = vrot.slane %v251, %v266
      %v268 = vcombine.high %v260, %v260
      %269 = vrot.lane.b32.xlu0 %v260, 127
      %v270 = vpop.permute.xlu0 %269
      %271 = vrot.lane.b32.xlu0 %v268, 127
      %v272 = vpop.permute.xlu0 %271
      %vm273 = vcmask 1039360
      %v274 = vsel %vm273, %v270, %v272
      %v275 = vcombine.low %v267, %v267
      %276 = vrot.lane.b32.xlu0 %v275, 126
      %v277 = vpop.permute.xlu0 %276
      %278 = vrot.lane.b32.xlu0 %v267, 126
      %v279 = vpop.permute.xlu0 %278
      %vm280 = vcmask 1031168
      %v281 = vsel %vm280, %v277, %v279
      %v282 = vcombine.low %v260, %v260
      %283 = vrot.lane.b32.xlu0 %v282, 110
      %v284 = vpop.permute.xlu0 %283
      %285 = vrot.lane.b32.xlu0 %v260, 110
      %v286 = vpop.permute.xlu0 %285
      %vm287 = vcmask 900096
      %v288 = vsel %vm287, %v284, %v286
      %v289 = vcombine.high %v267, %v267
      %290 = vrot.lane.b32.xlu0 %v267, 109
      %v291 = vpop.permute.xlu0 %290
      %292 = vrot.lane.b32.xlu0 %v289, 109
      %v293 = vpop.permute.xlu0 %292
      %vm294 = vcmask 891904
      %v295 = vsel %vm294, %v291, %v293
      %296 = vrot.lane.b32.xlu0 %v260, 108
      %v297 = vpop.permute.xlu0 %296
      %298 = vrot.lane.b32.xlu0 %v268, 108
      %v299 = vpop.permute.xlu0 %298
      %vm300 = vcmask 883712
      %v301 = vsel %vm300, %v297, %v299
      %302 = vrot.lane.b32.xlu0 %v275, 92
      %v303 = vpop.permute.xlu0 %302
      %304 = vrot.lane.b32.xlu0 %v267, 92
      %v305 = vpop.permute.xlu0 %304
      %vm306 = vcmask 752640
      %v307 = vsel %vm306, %v303, %v305
      %308 = vrot.lane.b32.xlu0 %v282, 91
      %v309 = vpop.permute.xlu0 %308
      %310 = vrot.lane.b32.xlu0 %v260, 91
      %v311 = vpop.permute.xlu0 %310
      %vm312 = vcmask 744448
      %v313 = vsel %vm312, %v309, %v311
      %314 = vrot.lane.b32.xlu0 %v267, 90
      %v315 = vpop.permute.xlu0 %314
      %316 = vrot.lane.b32.xlu0 %v289, 90
      %v317 = vpop.permute.xlu0 %316
      %vm318 = vcmask 736256
      %v319 = vsel %vm318, %v315, %v317
      %vm320 = vcmask 1041408
      %v323 = vsel %vm320, %v251, %v274
      %vm324 = vcmask 1043456
      %v326 = vsel %vm324, %v323, %v281
      %vm327 = vcmask 1045504
      %v329 = vsel %vm327, %v326, %v288
      %v333 = vsel %vm320, %v295, %v301
      %v335 = vsel %vm324, %v333, %v307
      %v337 = vsel %vm327, %v335, %v313
      %v341 = vsel %vm320, %v319, 0
      %v343 = vld [vmem:[%s1] sm:$0x1]
      %v344 = vld [vmem:[%s2] sm:$0x3]
      %346 = vset.pattern.permute.xlu0 0
      %347 = vperm.xlu0 %346, %v344
      %v348 = vpop.permute.xlu0 %347
      %vm350 = vcmask 392192
      %v352 = vsel %vm350, %v343, 0
      %354 = vmatprep.subr.bf16.mxu0 0
      %355 = vmatpush1.bf16.msra.mxu0 %v329
      %356 = vmatprep.subr.bf16.mxu0 0
      %357 = vmatpush1.bf16.msra.mxu0 %v337
      %358 = vmatprep.subr.bf16.mxu0 0
      %359 = vmatpush1.bf16.msra.mxu0 %v341
      %360 = vmatprep.subr.bf16.mxu0 0
      %361 = vmatpush1.bf16.msra.mxu0 0
      %362 = vmatprep.subr.bf16.mxu0 0
      %363 = vmatpush1.bf16.msra.mxu0 0
      %364 = vmatprep.subr.bf16.mxu0 0
      %365 = vmatpush1.bf16.msra.mxu0 0
      %366 = vmatprep.subr.bf16.mxu0 0
      %367 = vmatpush1.bf16.msra.mxu0 0
      %368 = vmatprep.subr.bf16.mxu0 0
      %369 = vmatpush1.bf16.msra.mxu0 0
      %370 = vmatprep.subr.bf16.mxu0 0
      %371 = vmatpush1.bf16.msra.mxu0 0
      %372 = vmatprep.subr.bf16.mxu0 0
      %373 = vmatpush1.bf16.msra.mxu0 0
      %374 = vmatprep.subr.bf16.mxu0 0
      %375 = vmatpush1.bf16.msra.mxu0 0
      %376 = vmatprep.subr.bf16.mxu0 0
      %377 = vmatpush1.bf16.msra.mxu0 0
      %378 = vmatprep.subr.bf16.mxu0 0
      %379 = vmatpush1.bf16.msra.mxu0 0
      %380 = vmatprep.subr.bf16.mxu0 0
      %381 = vmatpush1.bf16.msra.mxu0 0
      %382 = vmatprep.subr.bf16.mxu0 0
      %383 = vmatpush1.bf16.msra.mxu0 0
      %384 = vmatprep.subr.bf16.mxu0 0
      %385 = vmatpush1.bf16.msra.mxu0 0
      %386 = vmatprep.mubr.bf16.mxu0 0
      %387 = vmatmul.mubr.bf16.gmra.mrb[0].mxu0 %v352
      %v388 = vpop.f32.mrb[0].mxu0
      %v389 = vadd.f32 %v348, %v388
      %v390 = vpop.f32.mrb[0].mxu0
      %v391 = vpop.f32.mrb[0].mxu0
      %v392 = vpop.f32.mrb[0].mxu0
      %393 = vdwg.mxu0
      %v394 = vmax.f32 %v389, 0.0
      %v395 = vld [vmem:[%s3] sm:$0xf]
      %v396 = vpack.c.bf16 %v394, %v394
      %v397 = vld [vmem:[%s4] sm:$0xff]
      %399 = vset.pattern.permute.xlu0 0
      %400 = vperm.xlu0 %399, %v397
      %v401 = vpop.permute.xlu0 %400
      %vm403 = vcmask 15360
      %v405 = vsel %vm403, %v395, 0
      %vm407 = vcmask 1040384
      %v409 = vsel %vm407, %v396, 0
      %411 = vmatprep.subr.bf16.mxu0 0
      %412 = vmatpush1.bf16.msra.mxu0 %v409
      %413 = vmatprep.subr.bf16.mxu0 0
      %414 = vmatpush1.bf16.msra.mxu0 0
      %415 = vmatprep.subr.bf16.mxu0 0
      %416 = vmatpush1.bf16.msra.mxu0 0
      %417 = vmatprep.subr.bf16.mxu0 0
      %418 = vmatpush1.bf16.msra.mxu0 0
      %419 = vmatprep.subr.bf16.mxu0 0
      %420 = vmatpush1.bf16.msra.mxu0 0
      %421 = vmatprep.subr.bf16.mxu0 0
      %422 = vmatpush1.bf16.msra.mxu0 0
      %423 = vmatprep.subr.bf16.mxu0 0
      %424 = vmatpush1.bf16.msra.mxu0 0
      %425 = vmatprep.subr.bf16.mxu0 0
      %426 = vmatpush1.bf16.msra.mxu0 0
      %427 = vmatprep.subr.bf16.mxu0 0
      %428 = vmatpush1.bf16.msra.mxu0 0
      %429 = vmatprep.subr.bf16.mxu0 0
      %430 = vmatpush1.bf16.msra.mxu0 0
      %431 = vmatprep.subr.bf16.mxu0 0
      %432 = vmatpush1.bf16.msra.mxu0 0
      %433 = vmatprep.subr.bf16.mxu0 0
      %434 = vmatpush1.bf16.msra.mxu0 0
      %435 = vmatprep.subr.bf16.mxu0 0
      %436 = vmatpush1.bf16.msra.mxu0 0
      %437 = vmatprep.subr.bf16.mxu0 0
      %438 = vmatpush1.bf16.msra.mxu0 0
      %439 = vmatprep.subr.bf16.mxu0 0
      %440 = vmatpush1.bf16.msra.mxu0 0
      %441 = vmatprep.subr.bf16.mxu0 0
      %442 = vmatpush1.bf16.msra.mxu0 0
      %443 = vmatprep.mubr.bf16.mxu0 0
      %444 = vmatmul.mubr.bf16.gmra.mrb[0].mxu0 %v405
      %v445 = vpop.f32.mrb[0].mxu0
      %v446 = vadd.f32 %v401, %v445
      %v447 = vpop.f32.mrb[0].mxu0
      %v448 = vpop.f32.mrb[0].mxu0
      %v449 = vpop.f32.mrb[0].mxu0
      %450 = vdwg.mxu0
      %v451 = vmax.f32 %v446, 0.0
      %v452 = vpack.c.bf16 %v451, %v451
      %453 = vst [vmem:[%s244] sm:$0xf] %v452
      %p454 = scmp.lt.s32.totalorder %s20, 1
      %s455 = scalar_select %p454, %s20, 1
      %p456 = scmp.lt.s32.totalorder %s21, 2
      %s457 = scalar_select %p456, %s21, 2
      %s458 = smul.addr %s455, 3
      %s459 = sadd.s32 %s457, %s458
      %s460 = smul.addr %s459, 4
      %s461 = scalar_lea.vmem %s5, %s460
      // Predicated region
      $region41: #{double_conv_pad_pallas.1} parent=39 // pred_check
        %p462 = pneg %p158
      $region42: #{double_conv_pad_pallas.1} parent=39 // pred_check_branch
        %464 = sbr.rel (%p462) target = $region44
      $region43: #{double_conv_pad_pallas.1} parent=39 // pred_region
        _
      $region44: #{double_conv_pad_pallas.1} parent=39 // pred_fallthru
        _
    $region40: #{double_conv_pad_pallas.1} parent=5 // pred_fallthru
      _
    %p465 = scmp.le.s32.totalorder 2, %s11
    // Predicated region
    $region45: #{double_conv_pad_pallas.1} parent=5 // pred_check
      %p466 = pneg %p465
    $region46: #{double_conv_pad_pallas.1} parent=5 // pred_check_branch
      %468 = sbr.rel (%p466) target = $region48
    $region47: #{double_conv_pad_pallas.1} parent=5 // pred_region
      %s469 = ssub.s32 %s11, 2
      // Predicated region
      $region49: #{double_conv_pad_pallas.1} parent=47 // pred_check
        %p470 = pneg %p164
      $region50: #{double_conv_pad_pallas.1} parent=47 // pred_check_branch
        %472 = sbr.rel (%p470) target = $region52
      $region51: #{double_conv_pad_pallas.1} parent=47 // pred_region
        %p473 = scmp.lt.s32.totalorder %s22, 1
        %s474 = scalar_select %p473, %s22, 1
        %p475 = scmp.lt.s32.totalorder %s23, 2
        %s476 = scalar_select %p475, %s23, 2
        %s477 = smul.addr %s474, 3
        %s478 = sadd.s32 %s476, %s477
        %s479 = smul.addr %s478, 4
        %s480 = scalar_lea.vmem %s5, %s479
      $region52: #{double_conv_pad_pallas.1} parent=47 // pred_fallthru
        _
    $region48: #{double_conv_pad_pallas.1} parent=5 // pred_fallthru
      _
  $region6: #{double_conv_pad_pallas.1} parent=0 // loop_footer
    %s15 = sadd.s32 1, %s11
  $region7: #{double_conv_pad_pallas.1} parent=0 // loop_footer_branch
    %10 = sbr.rel target = $region3
  $region8: #{double_conv_pad_pallas.1} parent=0 // loop_exit
    _

</llo_original>
